<compile_context>
chip_gen: v5e
topology: v5e:2x2
jax: 0.10.0
libtpu: 0.0.40
codegen_flags: <defaults>
</compile_context>

<pallas_src>
import math

import jax
import jax.numpy as jnp
from jax.experimental import pallas as pl
from jax.experimental.pallas import tpu as pltpu


def critic_kernel(s_ref, a_ref, w1_ref, b1_ref, w2s_ref, w2a_ref, b2_ref,
                  w3_ref, b3_ref, o_ref):
    # Cast activations to bf16 in VMEM (inputs are streamed as raw f32).
    s = s_ref[...].astype(jnp.bfloat16)
    a = a_ref[...].astype(jnp.bfloat16)

    # fcs1 + ReLU (bf16 operands, f32 MXU accumulation, f32 elementwise).
    xs = jnp.dot(s, w1_ref[...],
                 preferred_element_type=jnp.float32) + b1_ref[...]
    xs = jnp.maximum(xs, 0.0)

    # fc2 on concat(xs, action) expressed as two matmuls + shared bias, ReLU.
    h2 = jnp.dot(xs.astype(jnp.bfloat16), w2s_ref[...],
                 preferred_element_type=jnp.float32)
    h2 = h2 + jnp.dot(a, w2a_ref[...],
                      preferred_element_type=jnp.float32) + b2_ref[...]
    h2 = jnp.maximum(h2, 0.0)

    # fc3 (1-wide linear Q head): VPU multiply + XLU lane reduction against
    # the f32 w3 row.  The (TB, 1) store is a short masked vst, but the HBM
    # writeback drops to 4 B per batch row (128x fewer bytes than a padded
    # 128-lane head), which dominates on every generation.
    q = jnp.sum(h2 * w3_ref[...], axis=-1, keepdims=True) + b3_ref[...]
    o_ref[...] = q.astype(o_ref.dtype)


def _round_up(x, m):
    return (x + m - 1) // m * m


def _pad2(a, rows, cols):
    return jnp.pad(a, ((0, rows - a.shape[0]), (0, cols - a.shape[1])))


def init_critic_params(key, state_size, action_size, fcs1_units=200,
                       fc2_units=150):
    """Deterministic init mirroring Critic.reset_parameters().

    hidden_init() uses weight.size()[0] == out_features as "fan_in"
    (faithful to the reference code). Biases keep the PyTorch nn.Linear
    default: U(-1/sqrt(in_features), 1/sqrt(in_features)).
    Weights stored as [in_features, out_features].
    """
    ks = jax.random.split(key, 6)

    def uni(k, shape, lim):
        return jax.random.uniform(k, shape, jnp.float32, minval=-lim, maxval=lim)

    return {
        "w1": uni(ks[0], (state_size, fcs1_units), 1.0 / math.sqrt(fcs1_units)),
        "b1": uni(ks[1], (1, fcs1_units), 1.0 / math.sqrt(state_size)),
        "w2": uni(ks[2], (fcs1_units + action_size, fc2_units),
                  1.0 / math.sqrt(fc2_units)),
        "b2": uni(ks[3], (1, fc2_units),
                  1.0 / math.sqrt(fcs1_units + action_size)),
        "w3": uni(ks[4], (fc2_units, 1), 0.003),
        "b3": uni(ks[5], (1, 1), 1.0 / math.sqrt(fc2_units)),
    }


def prepare_critic_params(params):
    """One-time host-side prep: split fc2's weight into state/action paths,
    zero-pad hidden (output-feature) dims to multiples of 128, cast matmul
    weights to bf16.  Contraction dims of w1/w2a keep their real sizes
    (state_size / action_size) so activations need no feature padding.
    Biases and the fc3 row stay f32 (post-accumulation VPU path)."""
    S, F1 = params["w1"].shape
    F2 = params["w2"].shape[1]
    A = params["w2"].shape[0] - F1
    F1_pad = _round_up(F1, 128)
    F2_pad = _round_up(F2, 128)

    w2s = params["w2"][:F1, :]   # rows multiplying xs
    w2a = params["w2"][F1:, :]   # rows multiplying action

    return {
        "w1": _pad2(params["w1"], S, F1_pad).astype(jnp.bfloat16),
        "b1": _pad2(params["b1"], 1, F1_pad),
        "w2s": _pad2(w2s, F1_pad, F2_pad).astype(jnp.bfloat16),
        "w2a": _pad2(w2a, A, F2_pad).astype(jnp.bfloat16),
        "b2": _pad2(params["b2"], 1, F2_pad),
        "w3t": _pad2(params["w3"].T, 1, F2_pad),   # (1, F2_pad) f32 row
        "b3": params["b3"].astype(jnp.float32),    # (1, 1) f32
    }


@jax.jit
def critic_forward(state, action, prep):
    """state: [B, state_size] f32, action: [B, action_size] f32 -> [B, 1] f32."""
    B = state.shape[0]
    S = prep["w1"].shape[0]
    A = prep["w2a"].shape[0]
    assert state.shape[1] == S and action.shape[1] == A

    # Batch tile: as large as possible (cap 512 -- ~85% of HBM roofline in
    # tile sweeps) to amortize per-grid-step overhead; ceil(B/2) keeps the
    # grid length >= 2 whenever B allows so both v7x TensorCores get work.
    TB = max(8, min(512, _round_up(pl.cdiv(B, 2), 8)))
    B_pad = _round_up(B, TB)
    if B_pad != B:  # zero rows are inert; they are sliced off below
        state = jnp.pad(state, ((0, B_pad - B), (0, 0)))
        action = jnp.pad(action, ((0, B_pad - B), (0, 0)))

    weights = (prep["w1"], prep["b1"], prep["w2s"], prep["w2a"], prep["b2"],
               prep["w3t"], prep["b3"])

    batch_spec = lambda cols: pl.BlockSpec((TB, cols), lambda i: (i, 0))
    resident = lambda a: pl.BlockSpec(a.shape, lambda i: (0, 0))

    out = pl.pallas_call(
        critic_kernel,
        out_shape=jax.ShapeDtypeStruct((B_pad, 1), jnp.float32),
        grid=(B_pad // TB,),
        in_specs=[batch_spec(S), batch_spec(A)]
                 + [resident(w) for w in weights],
        out_specs=pl.BlockSpec((TB, 1), lambda i: (i, 0)),
        compiler_params=pltpu.CompilerParams(
            dimension_semantics=("parallel",),     # megacore sharding on v7x
            vmem_limit_bytes=32 * 1024 * 1024,     # safe on v5e/v6e/v7x
        ),
    )(state, action, *weights)

    return out[:B]


def critic_reference(state, action, params):
    """Plain-JAX reference mirroring the kernel's numerics (bf16 matmul
    operands for fcs1/fc2, f32 accumulation, f32 fc3) -- same math as the
    PyTorch Critic.forward."""
    w1 = params["w1"].astype(jnp.bfloat16)
    w2 = params["w2"].astype(jnp.bfloat16)
    xs = jnp.maximum(
        jnp.dot(state.astype(jnp.bfloat16), w1,
                preferred_element_type=jnp.float32) + params["b1"], 0.0)
    x = jnp.concatenate([xs, action], axis=1).astype(jnp.bfloat16)
    h = jnp.maximum(
        jnp.dot(x, w2, preferred_element_type=jnp.float32) + params["b2"], 0.0)
    return jnp.dot(h, params["w3"]) + params["b3"]


if __name__ == "__main__":
    state_size = 33      # e.g. Reacher observation dim
    action_size = 4

    key = jax.random.PRNGKey(0)
    params = init_critic_params(jax.random.fold_in(key, 0), state_size,
                                action_size)
    prep = prepare_critic_params(params)

    # Cover the three code paths: single-tile tiny batch, padded multi-tile
    # batch, exact two-tile batch.
    for batch in (8, 100, 384):
        skey, akey = jax.random.split(jax.random.fold_in(key, batch))
        state = jax.random.normal(skey, (batch, state_size), jnp.float32)
        action = jnp.tanh(jax.random.normal(akey, (batch, action_size),
                                            jnp.float32))

        q = jax.block_until_ready(critic_forward(state, action, prep))
        ref = critic_reference(state, action, params)
        assert q.shape == (batch, 1)
        err = float(jnp.max(jnp.abs(q - ref)))
        assert jnp.allclose(q, ref, atol=2e-3, rtol=2e-3), (
            f"batch={batch}: max abs diff {err}")

    print("KERNEL_OK")
</pallas_src>

<mosaic_0001>
module attributes {stable_mosaic.version = 11 : i64} {
  func.func @critic_kernel(%arg0: i32, %arg1: memref<8x33xf32, #tpu.memory_space<vmem>>, %arg2: memref<8x4xf32, #tpu.memory_space<vmem>>, %arg3: memref<33x256xbf16, #tpu.memory_space<vmem>>, %arg4: memref<1x256xf32, #tpu.memory_space<vmem>>, %arg5: memref<256x256xbf16, #tpu.memory_space<vmem>>, %arg6: memref<4x256xbf16, #tpu.memory_space<vmem>>, %arg7: memref<1x256xf32, #tpu.memory_space<vmem>>, %arg8: memref<1x256xf32, #tpu.memory_space<vmem>>, %arg9: memref<1x1xf32, #tpu.memory_space<vmem>>, %arg10: memref<8x1xf32, #tpu.memory_space<vmem>>) attributes {dimension_semantics = [#tpu.dimension_semantics<parallel>], iteration_bounds = array<i64: 1>, scalar_prefetch = 0 : i64, scratch_operands = 0 : i64, tpu.core_type = #tpu.core_type<tc>, window_params = [{transform_indices = @transform_0, window_bounds = array<i64: 8, 33>}, {transform_indices = @transform_1, window_bounds = array<i64: 8, 4>}, {pipeline_mode = #tpu.pipeline_mode<synchronous>, transform_indices = @transform_2, window_bounds = array<i64: 33, 256>}, {pipeline_mode = #tpu.pipeline_mode<synchronous>, transform_indices = @transform_3, window_bounds = array<i64: 1, 256>}, {pipeline_mode = #tpu.pipeline_mode<synchronous>, transform_indices = @transform_4, window_bounds = array<i64: 256, 256>}, {pipeline_mode = #tpu.pipeline_mode<synchronous>, transform_indices = @transform_5, window_bounds = array<i64: 4, 256>}, {pipeline_mode = #tpu.pipeline_mode<synchronous>, transform_indices = @transform_6, window_bounds = array<i64: 1, 256>}, {pipeline_mode = #tpu.pipeline_mode<synchronous>, transform_indices = @transform_7, window_bounds = array<i64: 1, 256>}, {pipeline_mode = #tpu.pipeline_mode<synchronous>, transform_indices = @transform_8, window_bounds = array<i64: 1, 1>}, {transform_indices = @transform_9, window_bounds = array<i64: 8, 1>}]} {
    %c0 = arith.constant 0 : index
    %c0_0 = arith.constant 0 : index
    %0 = vector.load %arg1[%c0, %c0_0] : memref<8x33xf32, #tpu.memory_space<vmem>>, vector<8x33xf32>
    %1 = arith.truncf %0 : vector<8x33xf32> to vector<8x33xbf16>
    %c0_1 = arith.constant 0 : index
    %c0_2 = arith.constant 0 : index
    %2 = vector.load %arg2[%c0_1, %c0_2] : memref<8x4xf32, #tpu.memory_space<vmem>>, vector<8x4xf32>
    %3 = arith.truncf %2 : vector<8x4xf32> to vector<8x4xbf16>
    %c0_3 = arith.constant 0 : index
    %c0_4 = arith.constant 0 : index
    %4 = vector.load %arg3[%c0_3, %c0_4] : memref<33x256xbf16, #tpu.memory_space<vmem>>, vector<33x256xbf16>
    %cst = arith.constant dense<0.000000e+00> : vector<8x256xf32>
    %5 = tpu.matmul %1, %4, %cst {dimension_numbers = #tpu.dot_dimension_numbers<[1], [0], [0], [1], [0, 0, 1, 1], [], []>} : vector<8x33xbf16>, vector<33x256xbf16>, vector<8x256xf32> -> vector<8x256xf32>
    %c0_5 = arith.constant 0 : index
    %c0_6 = arith.constant 0 : index
    %6 = vector.load %arg4[%c0_5, %c0_6] : memref<1x256xf32, #tpu.memory_space<vmem>>, vector<1x256xf32>
    %7 = vector.broadcast %6 : vector<1x256xf32> to vector<8x256xf32>
    %8 = arith.addf %5, %7 : vector<8x256xf32>
    %cst_7 = arith.constant 0.000000e+00 : f32
    %9 = vector.broadcast %cst_7 : f32 to vector<8x256xf32>
    %10 = arith.maximumf %8, %9 : vector<8x256xf32>
    %11 = arith.truncf %10 : vector<8x256xf32> to vector<8x256xbf16>
    %c0_8 = arith.constant 0 : index
    %c0_9 = arith.constant 0 : index
    %12 = vector.load %arg5[%c0_8, %c0_9] : memref<256x256xbf16, #tpu.memory_space<vmem>>, vector<256x256xbf16>
    %cst_10 = arith.constant dense<0.000000e+00> : vector<8x256xf32>
    %13 = tpu.matmul %11, %12, %cst_10 {dimension_numbers = #tpu.dot_dimension_numbers<[1], [0], [0], [1], [0, 0, 1, 1], [], []>} : vector<8x256xbf16>, vector<256x256xbf16>, vector<8x256xf32> -> vector<8x256xf32>
    %c0_11 = arith.constant 0 : index
    %c0_12 = arith.constant 0 : index
    %14 = vector.load %arg6[%c0_11, %c0_12] : memref<4x256xbf16, #tpu.memory_space<vmem>>, vector<4x256xbf16>
    %cst_13 = arith.constant dense<0.000000e+00> : vector<8x256xf32>
    %15 = tpu.matmul %3, %14, %cst_13 {dimension_numbers = #tpu.dot_dimension_numbers<[1], [0], [0], [1], [0, 0, 1, 1], [], []>} : vector<8x4xbf16>, vector<4x256xbf16>, vector<8x256xf32> -> vector<8x256xf32>
    %16 = arith.addf %13, %15 : vector<8x256xf32>
    %c0_14 = arith.constant 0 : index
    %c0_15 = arith.constant 0 : index
    %17 = vector.load %arg7[%c0_14, %c0_15] : memref<1x256xf32, #tpu.memory_space<vmem>>, vector<1x256xf32>
    %18 = vector.broadcast %17 : vector<1x256xf32> to vector<8x256xf32>
    %19 = arith.addf %16, %18 : vector<8x256xf32>
    %cst_16 = arith.constant 0.000000e+00 : f32
    %20 = vector.broadcast %cst_16 : f32 to vector<8x256xf32>
    %21 = arith.maximumf %19, %20 : vector<8x256xf32>
    %c0_17 = arith.constant 0 : index
    %c0_18 = arith.constant 0 : index
    %22 = vector.load %arg8[%c0_17, %c0_18] : memref<1x256xf32, #tpu.memory_space<vmem>>, vector<1x256xf32>
    %23 = vector.broadcast %22 : vector<1x256xf32> to vector<8x256xf32>
    %24 = arith.mulf %21, %23 : vector<8x256xf32>
    %cst_19 = arith.constant dense<0.000000e+00> : vector<8xf32>
    %25 = vector.multi_reduction <add>, %24, %cst_19 [1] : vector<8x256xf32> to vector<8xf32>
    %26 = vector.shape_cast %25 : vector<8xf32> to vector<8x1xf32>
    %c0_20 = arith.constant 0 : index
    %c0_21 = arith.constant 0 : index
    %27 = vector.load %arg9[%c0_20, %c0_21] : memref<1x1xf32, #tpu.memory_space<vmem>>, vector<1x1xf32>
    %28 = vector.broadcast %27 : vector<1x1xf32> to vector<8x1xf32>
    %29 = arith.addf %26, %28 : vector<8x1xf32>
    %c0_22 = arith.constant 0 : index
    %c0_23 = arith.constant 0 : index
    %30 = vector.load %arg10[%c0_22, %c0_23] : memref<8x1xf32, #tpu.memory_space<vmem>>, vector<8x1xf32>
    tpu.vector_store %arg10[%c0_22, %c0_23], %29 {strides = array<i32>} : memref<8x1xf32, #tpu.memory_space<vmem>>, vector<8x1xf32>,
    return
  }
  func.func @transform_0(%arg0: i32) -> (i32, i32) {
    %c0_i32 = arith.constant 0 : i32
    %c0_i32_0 = arith.constant 0 : i32
    return %arg0, %c0_i32 : i32, i32
  }
  func.func @transform_1(%arg0: i32) -> (i32, i32) {
    %c0_i32 = arith.constant 0 : i32
    %c0_i32_0 = arith.constant 0 : i32
    return %arg0, %c0_i32 : i32, i32
  }
  func.func @transform_2(%arg0: i32) -> (i32, i32) {
    %c0_i32 = arith.constant 0 : i32
    %c0_i32_0 = arith.constant 0 : i32
    %c0_i32_1 = arith.constant 0 : i32
    return %c0_i32, %c0_i32_0 : i32, i32
  }
  func.func @transform_3(%arg0: i32) -> (i32, i32) {
    %c0_i32 = arith.constant 0 : i32
    %c0_i32_0 = arith.constant 0 : i32
    %c0_i32_1 = arith.constant 0 : i32
    return %c0_i32, %c0_i32_0 : i32, i32
  }
  func.func @transform_4(%arg0: i32) -> (i32, i32) {
    %c0_i32 = arith.constant 0 : i32
    %c0_i32_0 = arith.constant 0 : i32
    %c0_i32_1 = arith.constant 0 : i32
    return %c0_i32, %c0_i32_0 : i32, i32
  }
  func.func @transform_5(%arg0: i32) -> (i32, i32) {
    %c0_i32 = arith.constant 0 : i32
    %c0_i32_0 = arith.constant 0 : i32
    %c0_i32_1 = arith.constant 0 : i32
    return %c0_i32, %c0_i32_0 : i32, i32
  }
  func.func @transform_6(%arg0: i32) -> (i32, i32) {
    %c0_i32 = arith.constant 0 : i32
    %c0_i32_0 = arith.constant 0 : i32
    %c0_i32_1 = arith.constant 0 : i32
    return %c0_i32, %c0_i32_0 : i32, i32
  }
  func.func @transform_7(%arg0: i32) -> (i32, i32) {
    %c0_i32 = arith.constant 0 : i32
    %c0_i32_0 = arith.constant 0 : i32
    %c0_i32_1 = arith.constant 0 : i32
    return %c0_i32, %c0_i32_0 : i32, i32
  }
  func.func @transform_8(%arg0: i32) -> (i32, i32) {
    %c0_i32 = arith.constant 0 : i32
    %c0_i32_0 = arith.constant 0 : i32
    %c0_i32_1 = arith.constant 0 : i32
    return %c0_i32, %c0_i32_0 : i32, i32
  }
  func.func @transform_9(%arg0: i32) -> (i32, i32) {
    %c0_i32 = arith.constant 0 : i32
    %c0_i32_0 = arith.constant 0 : i32
    return %arg0, %c0_i32 : i32, i32
  }
}

</mosaic_0001>

<llo_original>
// kernel: critic_forward.1
$region0: #{critic_forward.1}
  #allocation0 [shape = 'u32[]', space=smem, size = 0x4, offset = 0x4, fixed_abs, tag = 'smem constant byte address 0x4 - core index']
  #allocation1 [shape = 'u32[72,128]{1,0:T(1,128)}', space=vmem, size = 0x9000, scoped, tag = 'internal scratch']
  #allocation2 [shape = 'f32[1,1]{1,0:T(1,128)S(1)}', space=vmem, size = 0x200, scoped, tag = 'scoped memory for critic_forward.1']
  %s0 = inlined_call_operand.vmem [shape: f32[8,33], index: 0, kind: input, shape index: {}]
  %s1 = inlined_call_operand.vmem [shape: f32[8,4], index: 1, kind: input, shape index: {}]
  %s2 = inlined_call_operand.hbm [shape: bf16[33,256], index: 2, kind: input, shape index: {}]
  %s3 = inlined_call_operand.vmem [shape: f32[1,256], index: 3, kind: input, shape index: {}]
  %s4 = inlined_call_operand.hbm [shape: bf16[256,256], index: 4, kind: input, shape index: {}]
  %s5 = inlined_call_operand.vmem [shape: bf16[4,256], index: 5, kind: input, shape index: {}]
  %s6 = inlined_call_operand.vmem [shape: f32[1,256], index: 6, kind: input, shape index: {}]
  %s7 = inlined_call_operand.vmem [shape: f32[1,256], index: 7, kind: input, shape index: {}]
  %s8 = inlined_call_operand.<no memory space> [shape: f32[1,1], index: 8, kind: input, shape index: {}]
  %s9 = inlined_call_operand.vmem [shape: f32[8,1], index: 9, kind: output, shape index: {}]
  %s10 = sld [smem:[#allocation0]]
  $region54: #{critic_forward.1} parent=0
    _
  %s12 = ssub.s32 1, %s10
  %s13 = scalar_select 0, %s12, %s10
  %v14 = vstv %s8
  %15 = vst [vmem:[#allocation2] sm:$0x1] %v14
  $region1: #{critic_forward.1} parent=0
    #allocation3 [shape = 'u8[20480]{0}', space=vmem, size = 0x5000, scoped, tag = 'input window, operand 2, single buffered']
    #allocation4 [shape = 's32[1]{0}', space=sflag, size = 0x4, scoped, tag = 'scoped memory for critic_forward.1']
    #allocation5 [shape = 'u8[131072]{0}', space=vmem, size = 0x20000, scoped, tag = 'input window, operand 4, single buffered']
    #allocation6 [shape = 's32[1]{0}', space=sflag, size = 0x4, scoped, tag = 'scoped memory for critic_forward.1']
    %16 = vsyncpa [#allocation4], 0
    %17 = vsyncpa [#allocation6], 0
    // Predicated region
    $region2: #{critic_forward.1} parent=1 // pred_check
      _
    $region3: #{critic_forward.1} parent=1 // pred_check_branch
      %19 = sbr.rel (0) target = $region5
    $region4: #{critic_forward.1} parent=1 // pred_region
      _
    $region5: #{critic_forward.1} parent=1 // pred_fallthru
      _
    // Predicated region
    $region6: #{critic_forward.1} parent=1 // pred_check
      _
    $region7: #{critic_forward.1} parent=1 // pred_check_branch
      %21 = sbr.rel (0) target = $region9
    $region8: #{critic_forward.1} parent=1 // pred_region
      _
    $region9: #{critic_forward.1} parent=1 // pred_fallthru
      _
    // Predicated region
    $region10: #{critic_forward.1} parent=1 // pred_check
      _
    $region11: #{critic_forward.1} parent=1 // pred_check_branch
      %23 = sbr.rel (0) target = $region13
    $region12: #{critic_forward.1} parent=1 // pred_region
      %25 = vsyncadd [#allocation4], 0
      %s26 = sshll.u32 %s2, 4
      %s27 = int_to_ptr.hbm [resolvable:$true] %s26
      %s28 = sshll.u32 [#allocation3], 4
      %s29 = int_to_ptr.vmem [resolvable:$true] %s28
      %34 = dma.hbm_to_vmem [thread:$0]  %s27, 640, %s29, [#allocation4], 128, 128, 8
    $region13: #{critic_forward.1} parent=1 // pred_fallthru
      _
    // Predicated region
    $region14: #{critic_forward.1} parent=1 // pred_check
      _
    $region15: #{critic_forward.1} parent=1 // pred_check_branch
      %36 = sbr.rel (0) target = $region17
    $region16: #{critic_forward.1} parent=1 // pred_region
      _
    $region17: #{critic_forward.1} parent=1 // pred_fallthru
      _
    // Predicated region
    $region18: #{critic_forward.1} parent=1 // pred_check
      _
    $region19: #{critic_forward.1} parent=1 // pred_check_branch
      %38 = sbr.rel (0) target = $region21
    $region20: #{critic_forward.1} parent=1 // pred_region
      %40 = vsyncadd [#allocation6], 0
      %s41 = sshll.u32 %s4, 4
      %s42 = int_to_ptr.hbm [resolvable:$true] %s41
      %s43 = sshll.u32 [#allocation5], 4
      %s44 = int_to_ptr.vmem [resolvable:$true] %s43
      %49 = dma.hbm_to_vmem [thread:$0]  %s42, 4096, %s44, [#allocation6], 128, 128, 8
    $region21: #{critic_forward.1} parent=1 // pred_fallthru
      _
    // Predicated region
    $region22: #{critic_forward.1} parent=1 // pred_check
      _
    $region23: #{critic_forward.1} parent=1 // pred_check_branch
      %51 = sbr.rel (0) target = $region25
    $region24: #{critic_forward.1} parent=1 // pred_region
      _
    $region25: #{critic_forward.1} parent=1 // pred_fallthru
      _
    // Predicated region
    $region26: #{critic_forward.1} parent=1 // pred_check
      _
    $region27: #{critic_forward.1} parent=1 // pred_check_branch
      %53 = sbr.rel (0) target = $region29
    $region28: #{critic_forward.1} parent=1 // pred_region
      _
    $region29: #{critic_forward.1} parent=1 // pred_fallthru
      _
    // Predicated region
    $region30: #{critic_forward.1} parent=1 // pred_check
      _
    $region31: #{critic_forward.1} parent=1 // pred_check_branch
      %55 = sbr.rel (0) target = $region33
    $region32: #{critic_forward.1} parent=1 // pred_region
      _
    $region33: #{critic_forward.1} parent=1 // pred_fallthru
      _
    // Predicated region
    $region34: #{critic_forward.1} parent=1 // pred_check
      _
    $region35: #{critic_forward.1} parent=1 // pred_check_branch
      %57 = sbr.rel (0) target = $region37
    $region36: #{critic_forward.1} parent=1 // pred_region
      _
    $region37: #{critic_forward.1} parent=1 // pred_fallthru
      _
    // Predicated region
    $region38: #{critic_forward.1} parent=1 // pred_check
      _
    $region39: #{critic_forward.1} parent=1 // pred_check_branch
      %59 = sbr.rel (0) target = $region41
    $region40: #{critic_forward.1} parent=1 // pred_region
      %61 = dma.done [#allocation4], 640
    $region41: #{critic_forward.1} parent=1 // pred_fallthru
      _
    // Predicated region
    $region42: #{critic_forward.1} parent=1 // pred_check
      _
    $region43: #{critic_forward.1} parent=1 // pred_check_branch
      %63 = sbr.rel (0) target = $region45
    $region44: #{critic_forward.1} parent=1 // pred_region
      %65 = dma.done [#allocation6], 4096
    $region45: #{critic_forward.1} parent=1 // pred_fallthru
      _
    %v67 = vld [vmem:[%s0] sm:$0xff]
    %v68 = vpack.c.bf16 %v67, %v67
    %v69 = vld [vmem:[%s1] sm:$0xff]
    %v70 = vpack.c.bf16 %v69, %v69
    %v71 = vld [vmem:[#allocation3] sm:$0xff]
    %v72 = vld [vmem:[#allocation3 + $0x8] sm:$0xff]
    %v73 = vld [vmem:[#allocation3 + $0x10] sm:$0xff]
    %v74 = vld [vmem:[#allocation3 + $0x18] sm:$0xff]
    %v75 = vld [vmem:[#allocation3 + $0x20] sm:$0x11]
    %v76 = vld [vmem:[%s3] sm:$0x3]
    %v78 = vperm.slane %v76, 0
    %v79 = vperm.slane %v76, 1
    %v87 = vunpack.c.l.b16 %v71
    %v88 = vunpack.c.h.b16 %v71
    %v89 = vunpack.c.l.b16 %v72
    %v90 = vunpack.c.h.b16 %v72
    %v91 = vunpack.c.l.b16 %v73
    %v92 = vunpack.c.h.b16 %v73
    %v93 = vunpack.c.l.b16 %v74
    %v94 = vunpack.c.h.b16 %v74
    %v95 = vunpack.c.l.b16 %v75
    %v96 = vunpack.c.h.b16 %v75
    %v97 = vpack.c.b16 %v89, %v87
    %v98 = vpack.c.b16 %v90, %v88
    %v99 = vpack.c.b16 %v93, %v91
    %v100 = vpack.c.b16 %v94, %v92
    %v101 = vpack.c.b16 %v95, %v95
    %v102 = vpack.c.b16 %v96, %v96
    %vm107 = vcmask 269312
    %v109 = vsel %vm107, %v68, 0
    %vm111 = vcmask 1040384
    %v112 = vsel 0, 4294967295, 65535
    %v113 = vsel %vm111, %v112, 0
    %v115 = vand.u32 %v101, %v113
    %v118 = vand.u32 %v102, %v113
    %120 = vmatpush.bf16.msra.mxu0 0
    %121 = vmatpush.bf16.msra.mxu0 0
    %122 = vmatpush.bf16.msra.mxu0 0
    %123 = vmatpush.bf16.msra.mxu0 0
    %124 = vmatpush.bf16.msra.mxu0 0
    %125 = vmatpush.bf16.msra.mxu0 %v115
    %126 = vmatpush.bf16.msra.mxu0 %v99
    %127 = vmatpush.bf16.msra.mxu0 %v97
    %128 = vmatmul.bf16.gmra.mxu0 %v109
    %v129 = vpop.f32.mrf.mxu0
    %v130 = vadd.f32 %v78, %v129
    %v131 = vpop.f32.mrf.mxu0
    %132 = vdwg.mxu0
    %133 = vmatpush.bf16.msra.mxu0 0
    %134 = vmatpush.bf16.msra.mxu0 0
    %135 = vmatpush.bf16.msra.mxu0 0
    %136 = vmatpush.bf16.msra.mxu0 0
    %137 = vmatpush.bf16.msra.mxu0 0
    %138 = vmatpush.bf16.msra.mxu0 %v118
    %139 = vmatpush.bf16.msra.mxu0 %v100
    %140 = vmatpush.bf16.msra.mxu0 %v98
    %141 = vmatmul.bf16.gmra.mxu0 %v109
    %v142 = vpop.f32.mrf.mxu0
    %v143 = vadd.f32 %v79, %v142
    %v144 = vpop.f32.mrf.mxu0
    %145 = vdwg.mxu0
    %v146 = vmax.f32 %v130, 0.0
    %v147 = vmax.f32 %v143, 0.0
    %v148 = vpack.c.bf16 %v146, %v146
    %v149 = vpack.c.bf16 %v147, %v147
    %v150 = vld [vmem:[#allocation5] sm:$0xff]
    %v151 = vld [vmem:[#allocation5 + $0x8] sm:$0xff]
    %v152 = vld [vmem:[#allocation5 + $0x10] sm:$0xff]
    %v153 = vld [vmem:[#allocation5 + $0x18] sm:$0xff]
    %v154 = vld [vmem:[#allocation5 + $0x20] sm:$0xff]
    %v155 = vld [vmem:[#allocation5 + $0x28] sm:$0xff]
    %v156 = vld [vmem:[#allocation5 + $0x30] sm:$0xff]
    %v157 = vld [vmem:[#allocation5 + $0x38] sm:$0xff]
    %v158 = vld [vmem:[#allocation5 + $0x40] sm:$0xff]
    %v159 = vld [vmem:[#allocation5 + $0x48] sm:$0xff]
    %v160 = vld [vmem:[#allocation5 + $0x50] sm:$0xff]
    %v161 = vld [vmem:[#allocation5 + $0x58] sm:$0xff]
    %v162 = vld [vmem:[#allocation5 + $0x60] sm:$0xff]
    %v163 = vld [vmem:[#allocation5 + $0x68] sm:$0xff]
    %v164 = vld [vmem:[#allocation5 + $0x70] sm:$0xff]
    %v165 = vld [vmem:[#allocation5 + $0x78] sm:$0xff]
    %v166 = vld [vmem:[#allocation5 + $0x80] sm:$0xff]
    %v167 = vld [vmem:[#allocation5 + $0x88] sm:$0xff]
    %v168 = vld [vmem:[#allocation5 + $0x90] sm:$0xff]
    %v169 = vld [vmem:[#allocation5 + $0x98] sm:$0xff]
    %v170 = vld [vmem:[#allocation5 + $0xa0] sm:$0xff]
    %v171 = vld [vmem:[#allocation5 + $0xa8] sm:$0xff]
    %v172 = vld [vmem:[#allocation5 + $0xb0] sm:$0xff]
    %v173 = vld [vmem:[#allocation5 + $0xb8] sm:$0xff]
    %v174 = vld [vmem:[#allocation5 + $0xc0] sm:$0xff]
    %v175 = vld [vmem:[#allocation5 + $0xc8] sm:$0xff]
    %v176 = vld [vmem:[#allocation5 + $0xd0] sm:$0xff]
    %v177 = vld [vmem:[#allocation5 + $0xd8] sm:$0xff]
    %v178 = vld [vmem:[#allocation5 + $0xe0] sm:$0xff]
    %v179 = vld [vmem:[#allocation5 + $0xe8] sm:$0xff]
    %v180 = vld [vmem:[#allocation5 + $0xf0] sm:$0xff]
    %v181 = vld [vmem:[#allocation5 + $0xf8] sm:$0xff]
    %v182 = vld [vmem:[%s5] sm:$0xf]
    %184 = vst [vmem:[#allocation1] ss:$4 sm:$0xff] %v182
    %v185 = vld.sshfl [vmem:[#allocation1] sm:$0xff pattern:$0x73625140]
    %v186 = vld.sshfl [vmem:[#allocation1 + $0x8] sm:$0xff pattern:$0x73625140]
    %vm187 = vcmask 31744
    %v189 = vsel %vm187, %v70, 0
    %vm191 = vcmask 1041408
    %v192 = vsel %vm191, %v185, 0
    %v194 = vsel %vm191, %v186, 0
    %196 = vmatpush.bf16.msra.mxu0 0
    %197 = vmatpush.bf16.msra.mxu0 0
    %198 = vmatpush.bf16.msra.mxu0 0
    %199 = vmatpush.bf16.msra.mxu0 0
    %200 = vmatpush.bf16.msra.mxu0 0
    %201 = vmatpush.bf16.msra.mxu0 0
    %202 = vmatpush.bf16.msra.mxu0 0
    %203 = vmatpush.bf16.msra.mxu0 %v192
    %204 = vmatmul.bf16.gmra.mxu0 %v189
    %v205 = vpop.f32.mrf.mxu0
    %v206 = vadd.f32 0.0, %v205
    %v207 = vpop.f32.mrf.mxu0
    %208 = vdwg.mxu0
    %209 = vmatpush.bf16.msra.mxu0 0
    %210 = vmatpush.bf16.msra.mxu0 0
    %211 = vmatpush.bf16.msra.mxu0 0
    %212 = vmatpush.bf16.msra.mxu0 0
    %213 = vmatpush.bf16.msra.mxu0 0
    %214 = vmatpush.bf16.msra.mxu0 0
    %215 = vmatpush.bf16.msra.mxu0 0
    %216 = vmatpush.bf16.msra.mxu0 %v194
    %217 = vmatmul.bf16.gmra.mxu0 %v189
    %v218 = vpop.f32.mrf.mxu0
    %v219 = vadd.f32 0.0, %v218
    %v220 = vpop.f32.mrf.mxu0
    %221 = vdwg.mxu0
    %v254 = vunpack.c.l.b16 %v150
    %v255 = vunpack.c.h.b16 %v150
    %v256 = vunpack.c.l.b16 %v151
    %v257 = vunpack.c.h.b16 %v151
    %v258 = vunpack.c.l.b16 %v152
    %v259 = vunpack.c.h.b16 %v152
    %v260 = vunpack.c.l.b16 %v153
    %v261 = vunpack.c.h.b16 %v153
    %v262 = vunpack.c.l.b16 %v154
    %v263 = vunpack.c.h.b16 %v154
    %v264 = vunpack.c.l.b16 %v155
    %v265 = vunpack.c.h.b16 %v155
    %v266 = vunpack.c.l.b16 %v156
    %v267 = vunpack.c.h.b16 %v156
    %v268 = vunpack.c.l.b16 %v157
    %v269 = vunpack.c.h.b16 %v157
    %v270 = vunpack.c.l.b16 %v158
    %v271 = vunpack.c.h.b16 %v158
    %v272 = vunpack.c.l.b16 %v159
    %v273 = vunpack.c.h.b16 %v159
    %v274 = vunpack.c.l.b16 %v160
    %v275 = vunpack.c.h.b16 %v160
    %v276 = vunpack.c.l.b16 %v161
    %v277 = vunpack.c.h.b16 %v161
    %v278 = vunpack.c.l.b16 %v162
    %v279 = vunpack.c.h.b16 %v162
    %v280 = vunpack.c.l.b16 %v163
    %v281 = vunpack.c.h.b16 %v163
    %v282 = vunpack.c.l.b16 %v164
    %v283 = vunpack.c.h.b16 %v164
    %v284 = vunpack.c.l.b16 %v165
    %v285 = vunpack.c.h.b16 %v165
    %v286 = vunpack.c.l.b16 %v166
    %v287 = vunpack.c.h.b16 %v166
    %v288 = vunpack.c.l.b16 %v167
    %v289 = vunpack.c.h.b16 %v167
    %v290 = vunpack.c.l.b16 %v168
    %v291 = vunpack.c.h.b16 %v168
    %v292 = vunpack.c.l.b16 %v169
    %v293 = vunpack.c.h.b16 %v169
    %v294 = vunpack.c.l.b16 %v170
    %v295 = vunpack.c.h.b16 %v170
    %v296 = vunpack.c.l.b16 %v171
    %v297 = vunpack.c.h.b16 %v171
    %v298 = vunpack.c.l.b16 %v172
    %v299 = vunpack.c.h.b16 %v172
    %v300 = vunpack.c.l.b16 %v173
    %v301 = vunpack.c.h.b16 %v173
    %v302 = vunpack.c.l.b16 %v174
    %v303 = vunpack.c.h.b16 %v174
    %v304 = vunpack.c.l.b16 %v175
    %v305 = vunpack.c.h.b16 %v175
    %v306 = vunpack.c.l.b16 %v176
    %v307 = vunpack.c.h.b16 %v176
    %v308 = vunpack.c.l.b16 %v177
    %v309 = vunpack.c.h.b16 %v177
    %v310 = vunpack.c.l.b16 %v178
    %v311 = vunpack.c.h.b16 %v178
    %v312 = vunpack.c.l.b16 %v179
    %v313 = vunpack.c.h.b16 %v179
    %v314 = vunpack.c.l.b16 %v180
    %v315 = vunpack.c.h.b16 %v180
    %v316 = vunpack.c.l.b16 %v181
    %v317 = vunpack.c.h.b16 %v181
    %v318 = vpack.c.b16 %v256, %v254
    %v319 = vpack.c.b16 %v257, %v255
    %v320 = vpack.c.b16 %v260, %v258
    %v321 = vpack.c.b16 %v261, %v259
    %v322 = vpack.c.b16 %v264, %v262
    %v323 = vpack.c.b16 %v265, %v263
    %v324 = vpack.c.b16 %v268, %v266
    %v325 = vpack.c.b16 %v269, %v267
    %v326 = vpack.c.b16 %v272, %v270
    %v327 = vpack.c.b16 %v273, %v271
    %v328 = vpack.c.b16 %v276, %v274
    %v329 = vpack.c.b16 %v277, %v275
    %v330 = vpack.c.b16 %v280, %v278
    %v331 = vpack.c.b16 %v281, %v279
    %v332 = vpack.c.b16 %v284, %v282
    %v333 = vpack.c.b16 %v285, %v283
    %v334 = vpack.c.b16 %v288, %v286
    %v335 = vpack.c.b16 %v289, %v287
    %v336 = vpack.c.b16 %v292, %v290
    %v337 = vpack.c.b16 %v293, %v291
    %v338 = vpack.c.b16 %v296, %v294
    %v339 = vpack.c.b16 %v297, %v295
    %v340 = vpack.c.b16 %v300, %v298
    %v341 = vpack.c.b16 %v301, %v299
    %v342 = vpack.c.b16 %v304, %v302
    %v343 = vpack.c.b16 %v305, %v303
    %v344 = vpack.c.b16 %v308, %v306
    %v345 = vpack.c.b16 %v309, %v307
    %v346 = vpack.c.b16 %v312, %v310
    %v347 = vpack.c.b16 %v313, %v311
    %v348 = vpack.c.b16 %v316, %v314
    %v349 = vpack.c.b16 %v317, %v315
    %382 = vmatpush.bf16.msra.mxu0 %v332
    %383 = vmatpush.bf16.msra.mxu0 %v330
    %384 = vmatpush.bf16.msra.mxu0 %v328
    %385 = vmatpush.bf16.msra.mxu0 %v326
    %386 = vmatpush.bf16.msra.mxu0 %v324
    %387 = vmatpush.bf16.msra.mxu0 %v322
    %388 = vmatpush.bf16.msra.mxu0 %v320
    %389 = vmatpush.bf16.msra.mxu0 %v318
    %390 = vmatmul.bf16.gmra.mxu0 %v148
    %v391 = vpop.f32.mrf.mxu0
    %v392 = vadd.f32 %v206, %v391
    %v393 = vpop.f32.mrf.mxu0
    %394 = vdwg.mxu0
    %395 = vmatpush.bf16.msra.mxu0 %v348
    %396 = vmatpush.bf16.msra.mxu0 %v346
    %397 = vmatpush.bf16.msra.mxu0 %v344
    %398 = vmatpush.bf16.msra.mxu0 %v342
    %399 = vmatpush.bf16.msra.mxu0 %v340
    %400 = vmatpush.bf16.msra.mxu0 %v338
    %401 = vmatpush.bf16.msra.mxu0 %v336
    %402 = vmatpush.bf16.msra.mxu0 %v334
    %403 = vmatmul.bf16.gmra.mxu0 %v149
    %v404 = vpop.f32.mrf.mxu0
    %v405 = vadd.f32 %v392, %v404
    %v406 = vpop.f32.mrf.mxu0
    %407 = vdwg.mxu0
    %408 = vmatpush.bf16.msra.mxu0 %v333
    %409 = vmatpush.bf16.msra.mxu0 %v331
    %410 = vmatpush.bf16.msra.mxu0 %v329
    %411 = vmatpush.bf16.msra.mxu0 %v327
    %412 = vmatpush.bf16.msra.mxu0 %v325
    %413 = vmatpush.bf16.msra.mxu0 %v323
    %414 = vmatpush.bf16.msra.mxu0 %v321
    %415 = vmatpush.bf16.msra.mxu0 %v319
    %416 = vmatmul.bf16.gmra.mxu0 %v148
    %v417 = vpop.f32.mrf.mxu0
    %v418 = vadd.f32 %v219, %v417
    %v419 = vpop.f32.mrf.mxu0
    %420 = vdwg.mxu0
    %421 = vmatpush.bf16.msra.mxu0 %v349
    %422 = vmatpush.bf16.msra.mxu0 %v347
    %423 = vmatpush.bf16.msra.mxu0 %v345
    %424 = vmatpush.bf16.msra.mxu0 %v343
    %425 = vmatpush.bf16.msra.mxu0 %v341
    %426 = vmatpush.bf16.msra.mxu0 %v339
    %427 = vmatpush.bf16.msra.mxu0 %v337
    %428 = vmatpush.bf16.msra.mxu0 %v335
    %429 = vmatmul.bf16.gmra.mxu0 %v149
    %v430 = vpop.f32.mrf.mxu0
    %v431 = vadd.f32 %v418, %v430
    %v432 = vpop.f32.mrf.mxu0
    %433 = vdwg.mxu0
    %v434 = vld [vmem:[%s6] sm:$0x3]
    %v436 = vperm.slane %v434, 0
    %v437 = vperm.slane %v434, 1
    %v440 = vadd.f32 %v405, %v436
    %v441 = vadd.f32 %v431, %v437
    %v442 = vmax.f32 %v440, 0.0
    %v443 = vmax.f32 %v441, 0.0
    %v444 = vld [vmem:[%s7] sm:$0x3]
    %v446 = vperm.slane %v444, 0
    %v447 = vperm.slane %v444, 1
    %v450 = vmul.f32 %v442, %v446
    %v451 = vmul.f32 %v443, %v447
    %v452 = vadd.f32 %v450, %v451
    %453 = vadd.xlane.f32.xlu0 %v452
    %v454 = vpop.xlane.xlu0 %453
    %v455 = vld [vmem:[#allocation2] sm:$0x1]
    %v457 = vperm.slane %v455, 0
    %v459 = vadd.f32 %v454, %v457
    %vm460 = vcmask 7168
    %461 = vst.msk [vmem:[%s9] sm:$0xff] %vm460, %v459
    // Predicated region
    $region46: #{critic_forward.1} parent=1 // pred_check
      _
    $region47: #{critic_forward.1} parent=1 // pred_check_branch
      %463 = sbr.rel (0) target = $region49
    $region48: #{critic_forward.1} parent=1 // pred_region
      _
    $region49: #{critic_forward.1} parent=1 // pred_fallthru
      _
    // Predicated region
    $region50: #{critic_forward.1} parent=1 // pred_check
      _
    $region51: #{critic_forward.1} parent=1 // pred_check_branch
      %465 = sbr.rel (0) target = $region53
    $region52: #{critic_forward.1} parent=1 // pred_region
      _
    $region53: #{critic_forward.1} parent=1 // pred_fallthru
      _
    %466 = vsyncpa [#allocation4], 1
    %467 = vsyncpa [#allocation6], 1

</llo_original>
